<compile_context>
chip_gen: v5e
topology: v5e:2x2
jax: 0.10.0
libtpu: 0.0.40
codegen_flags: <defaults>
</compile_context>

<pallas_src>
import functools

import jax
import jax.numpy as jnp
from jax.experimental import pallas as pl
from jax.experimental.pallas import tpu as pltpu

NEG_INF = -1e30
LEAKY_SLOPE = 0.2  # PyG GATConv default negative_slope


def _round_up(a, b):
    return (a + b - 1) // b * b


def _pick_tiles(n):
    """(row_tile, col_tile) sized against VMEM on v5e/v6e/v7x (v7x = 64 MiB)."""
    if n <= 128:
        return 128, 128
    if n <= 1024:
        return 256, 256
    return 256, 512


# ---------------------------------------------------------------------------
# Kernel 1: feature transform + all attention logits in one MXU pass.
#   x1 = x @ W1          (stored bf16 for later MXU use)
#   E  = x1 @ A_att      (A_att block-diagonal (H*C, 2H)) -> e_src, e_dst
# ---------------------------------------------------------------------------
def _prep_kernel(x_ref, w1_ref, aatt_ref, x1_ref, esrc_ref, edst_ref, *, num_heads):
    x = x_ref[...].astype(jnp.float32)
    x1 = jnp.dot(x.astype(jnp.bfloat16), w1_ref[...].astype(jnp.bfloat16),
                 preferred_element_type=jnp.float32)                 # (TI, H*C)
    e = jnp.dot(x1.astype(jnp.bfloat16), aatt_ref[...].astype(jnp.bfloat16),
                preferred_element_type=jnp.float32)                  # (TI, 2H)
    x1_ref[...] = x1.astype(jnp.bfloat16)
    esrc_ref[...] = e[:, :num_heads]                                 # (TI, H)
    edst_ref[...] = e[:, num_heads:]                                 # (TI, H)


# ---------------------------------------------------------------------------
# Kernel 2: GATConv 1 (8 heads), flash-style online softmax over neighbor
# column tiles, fused with relu(+b1) and the layer-2 feature transform
# x2 = h1 @ w2 in the epilogue (h1 never leaves VMEM).
# ---------------------------------------------------------------------------
def _gat1_kernel(edst_ref, esrcT_ref, x1_ref, adj_ref, b1_ref, w2_ref,
                 x2_ref, m_ref, l_ref, acc_ref, *, num_heads, head_dim):
    H, C = num_heads, head_dim
    j = pl.program_id(1)

    @pl.when(j == 0)
    def _():
        m_ref[...] = jnp.full_like(m_ref, NEG_INF)
        l_ref[...] = jnp.zeros_like(l_ref)
        acc_ref[...] = jnp.zeros_like(acc_ref)

    e_dst = edst_ref[...]                                 # (TI, H)  f32
    e_src = esrcT_ref[...]                                # (H, TJ)  f32
    mask = adj_ref[...].astype(jnp.float32) > 0.0         # (TI, TJ) bool (f32 cmp: ok on v5e)
    x1j = x1_ref[...]                                     # (TJ, H*C) bf16

    for h in range(H):                                    # static unroll over heads
        s = e_dst[:, h:h + 1] + e_src[h:h + 1, :]         # (TI, TJ)
        s = jnp.where(s > 0, s, LEAKY_SLOPE * s)          # LeakyReLU
        s = jnp.where(mask, s, NEG_INF)                   # mask non-edges
        tile_max = jnp.max(s, axis=-1, keepdims=True)     # (TI, 1)
        m_old = m_ref[:, h:h + 1]
        m_new = jnp.maximum(m_old, tile_max)
        corr = jnp.exp(m_old - m_new)
        p = jnp.where(mask, jnp.exp(s - m_new), 0.0)      # f32 softmax math
        l_ref[:, h:h + 1] = corr * l_ref[:, h:h + 1] + jnp.sum(p, axis=-1, keepdims=True)
        acc_ref[:, h * C:(h + 1) * C] = (
            corr * acc_ref[:, h * C:(h + 1) * C]
            + jnp.dot(p.astype(jnp.bfloat16), x1j[:, h * C:(h + 1) * C],
                      preferred_element_type=jnp.float32))
        m_ref[:, h:h + 1] = m_new

    @pl.when(j == pl.num_programs(1) - 1)
    def _():
        inv_l = 1.0 / jnp.maximum(l_ref[...], 1e-30)      # (TI, H), guard isolated rows
        parts = [acc_ref[:, h * C:(h + 1) * C] * inv_l[:, h:h + 1] for h in range(H)]
        h1 = jnp.concatenate(parts, axis=-1) + b1_ref[...]          # (TI, H*C)
        h1 = jnp.maximum(h1, 0.0)                                   # .relu()
        # TODO(synk): training-mode dropout (p=0.5) not implemented; eval path only.
        x2_ref[...] = jnp.dot(h1.astype(jnp.bfloat16),
                              w2_ref[...].astype(jnp.bfloat16),
                              preferred_element_type=jnp.float32)   # (TI, 1)


# ---------------------------------------------------------------------------
# Kernel 3: GATConv 2 (1 head, out=1), flash over neighbor tiles; aggregation
# done as weighted row-sums (no 1-lane-wide MXU matmul). Emits per-node o2.
# ---------------------------------------------------------------------------
def _gat2_kernel(x2d_ref, x2s_ref, adj_ref, as2_ref, ad2_ref,
                 o2_ref, m_ref, l_ref, num_ref):
    j = pl.program_id(1)

    @pl.when(j == 0)
    def _():
        m_ref[...] = jnp.full_like(m_ref, NEG_INF)
        l_ref[...] = jnp.zeros_like(l_ref)
        num_ref[...] = jnp.zeros_like(num_ref)

    mask = adj_ref[...].astype(jnp.float32) > 0.0          # (TI, TJ)
    x2_dst = x2d_ref[...]                                  # (TI, 1)
    x2_src = x2s_ref[...]                                  # (1, TJ)
    s = ad2_ref[0] * x2_dst + as2_ref[0] * x2_src          # (TI, TJ)
    s = jnp.where(s > 0, s, LEAKY_SLOPE * s)
    s = jnp.where(mask, s, NEG_INF)
    tile_max = jnp.max(s, axis=-1, keepdims=True)
    m_new = jnp.maximum(m_ref[...], tile_max)
    corr = jnp.exp(m_ref[...] - m_new)
    p = jnp.where(mask, jnp.exp(s - m_new), 0.0)
    l_ref[...] = corr * l_ref[...] + jnp.sum(p, axis=-1, keepdims=True)
    num_ref[...] = corr * num_ref[...] + jnp.sum(p * x2_src, axis=-1, keepdims=True)
    m_ref[...] = m_new

    @pl.when(j == pl.num_programs(1) - 1)
    def _():
        o2_ref[...] = num_ref[...] / jnp.maximum(l_ref[...], 1e-30)


# ---------------------------------------------------------------------------
# Kernel 4: global_mean_pool over the valid (un-padded) nodes + bias b2.
# ---------------------------------------------------------------------------
def _pool_kernel(o2_ref, b2_ref, out_ref, *, num_valid):
    o2 = o2_ref[...]                                              # (Np, 1)
    rows = jax.lax.broadcasted_iota(jnp.int32, o2.shape, 0)
    valid = rows < num_valid
    s = jnp.sum(jnp.where(valid, o2, 0.0), axis=0, keepdims=True)  # (1, 1)
    out_ref[...] = s / float(num_valid) + b2_ref[0]


# ---------------------------------------------------------------------------
# Parameters (matches PyG GATConv(num_features, hdim//heads, heads) + GATConv(hdim,1))
# ---------------------------------------------------------------------------
def init_params(key, num_features, hdim=64, n_heads=8):
    c1 = hdim // n_heads
    k = jax.random.split(key, 8)

    def glorot(kk, shape, fan_in, fan_out):
        scale = jnp.sqrt(6.0 / (fan_in + fan_out))
        return jax.random.uniform(kk, shape, jnp.float32, -scale, scale)

    return {
        "w1":  glorot(k[0], (num_features, n_heads * c1), num_features, n_heads * c1),
        "b1":  jnp.zeros((1, n_heads * c1), jnp.float32),
        "as1": glorot(k[1], (n_heads, c1), c1, 1),   # att_src, per head
        "ad1": glorot(k[2], (n_heads, c1), c1, 1),   # att_dst, per head
        "w2":  glorot(k[3], (hdim, 1), hdim, 1),
        "b2":  jnp.zeros((1, 1), jnp.float32),
        "as2": glorot(k[4], (1, 1), 1, 1),
        "ad2": glorot(k[5], (1, 1), 1, 1),
    }


# ---------------------------------------------------------------------------
# Forward
# ---------------------------------------------------------------------------
def model_regressor_forward(x, edge_index, params):
    N, F = x.shape
    H, C = params["as1"].shape
    HC = H * C
    TI, TJ = _pick_tiles(N)
    Np = _round_up(N, max(TI, TJ))
    Gi, Gj = Np // TI, Np // TJ

    # ---- glue: dense bf16 adjacency mask + zero-padded node features ----
    # NOTE: duplicate edges collapse to a single 1 in the dense mask (PyG
    # softmaxes each edge instance separately; differs only for multi-edges).
    src, dst = edge_index[0], edge_index[1]
    adj = jnp.zeros((Np, Np), jnp.float32).at[dst, src].set(1.0)
    idx = jnp.arange(Np)
    adj = adj.at[idx, idx].set(1.0)          # self-loops (also keeps padded rows finite)
    adj = adj.astype(jnp.bfloat16)
    xp = jnp.zeros((Np, F), jnp.float32).at[:N].set(x.astype(jnp.float32))

    # Block-diagonal attention matrix (H*C, 2H): cols [0:H]=att_src, [H:2H]=att_dst.
    a_att = jnp.zeros((HC, 2 * H), jnp.float32)
    for h in range(H):
        a_att = a_att.at[h * C:(h + 1) * C, h].set(params["as1"][h])
        a_att = a_att.at[h * C:(h + 1) * C, H + h].set(params["ad1"][h])

    cp_par = pltpu.CompilerParams(dimension_semantics=("parallel",),
                                  vmem_limit_bytes=48 * 1024 * 1024)
    cp_2d = pltpu.CompilerParams(dimension_semantics=("parallel", "arbitrary"),
                                 vmem_limit_bytes=48 * 1024 * 1024)

    # ---- kernel 1: x1 = x @ W1,  E = x1 @ A_att ----
    x1_bf16, e_src, e_dst = pl.pallas_call(
        functools.partial(_prep_kernel, num_heads=H),
        grid=(Gi,),
        in_specs=[pl.BlockSpec((TI, F), lambda i: (i, 0)),
                  pl.BlockSpec((F, HC), lambda i: (0, 0)),
                  pl.BlockSpec((HC, 2 * H), lambda i: (0, 0))],
        out_specs=[pl.BlockSpec((TI, HC), lambda i: (i, 0)),
                   pl.BlockSpec((TI, H), lambda i: (i, 0)),
                   pl.BlockSpec((TI, H), lambda i: (i, 0))],
        out_shape=[jax.ShapeDtypeStruct((Np, HC), jnp.bfloat16),
                   jax.ShapeDtypeStruct((Np, H), jnp.float32),
                   jax.ShapeDtypeStruct((Np, H), jnp.float32)],
        compiler_params=cp_par,
    )(xp, params["w1"], a_att)

    e_srcT = e_src.T            # single (N,H)->(H,N) transpose (layout plumbing)

    # ---- kernel 2: GAT layer 1 (flash) fused with relu + h1 @ w2 ----
    x2 = pl.pallas_call(
        functools.partial(_gat1_kernel, num_heads=H, head_dim=C),
        grid=(Gi, Gj),
        in_specs=[pl.BlockSpec((TI, H), lambda i, j: (i, 0)),     # e_dst
                  pl.BlockSpec((H, TJ), lambda i, j: (0, j)),     # e_src^T
                  pl.BlockSpec((TJ, HC), lambda i, j: (j, 0)),    # x1 (bf16)
                  pl.BlockSpec((TI, TJ), lambda i, j: (i, j)),    # adj (bf16)
                  pl.BlockSpec((1, HC), lambda i, j: (0, 0)),     # b1
                  pl.BlockSpec((HC, 1), lambda i, j: (0, 0))],    # w2
        out_specs=pl.BlockSpec((TI, 1), lambda i, j: (i, 0)),
        out_shape=jax.ShapeDtypeStruct((Np, 1), jnp.float32),
        scratch_shapes=[pltpu.VMEM((TI, H), jnp.float32),         # running max
                        pltpu.VMEM((TI, H), jnp.float32),         # running denom
                        pltpu.VMEM((TI, HC), jnp.float32)],       # running numerator
        compiler_params=cp_2d,
        cost_estimate=pl.CostEstimate(
            flops=2 * Np * Np * HC + 10 * Np * Np * H,
            transcendentals=Np * Np * H,
            bytes_accessed=Np * Np * 2 + Gi * Np * HC * 2 + Np * 4),
    )(e_dst, e_srcT, x1_bf16, adj, params["b1"], params["w2"])

    x2t = x2.reshape(1, Np)     # lane-dense view of x2 for the neighbor axis

    # ---- kernel 3: GAT layer 2 (flash), aggregation via weighted row-sums ----
    o2 = pl.pallas_call(
        _gat2_kernel,
        grid=(Gi, Gj),
        in_specs=[pl.BlockSpec((TI, 1), lambda i, j: (i, 0)),     # x2 (dst)
                  pl.BlockSpec((1, TJ), lambda i, j: (0, j)),     # x2^T (src)
                  pl.BlockSpec((TI, TJ), lambda i, j: (i, j)),    # adj (bf16)
                  pl.BlockSpec(memory_space=pltpu.MemorySpace.SMEM),   # att_src2
                  pl.BlockSpec(memory_space=pltpu.MemorySpace.SMEM)],  # att_dst2
        out_specs=pl.BlockSpec((TI, 1), lambda i, j: (i, 0)),
        out_shape=jax.ShapeDtypeStruct((Np, 1), jnp.float32),
        scratch_shapes=[pltpu.VMEM((TI, 1), jnp.float32),
                        pltpu.VMEM((TI, 1), jnp.float32),
                        pltpu.VMEM((TI, 1), jnp.float32)],
        compiler_params=cp_2d,
        cost_estimate=pl.CostEstimate(
            flops=8 * Np * Np, transcendentals=Np * Np,
            bytes_accessed=Np * Np * 2 + 2 * Np * 4),
    )(x2, x2t, adj, params["as2"].reshape(-1), params["ad2"].reshape(-1))

    # ---- kernel 4: global_mean_pool (batch == zeros -> single graph) + b2 ----
    out = pl.pallas_call(
        functools.partial(_pool_kernel, num_valid=N),
        in_specs=[pl.BlockSpec(memory_space=pltpu.MemorySpace.VMEM),
                  pl.BlockSpec(memory_space=pltpu.MemorySpace.SMEM)],
        out_specs=pl.BlockSpec(memory_space=pltpu.MemorySpace.VMEM),
        out_shape=jax.ShapeDtypeStruct((1, 1), jnp.float32),
    )(o2, params["b2"].reshape(-1))

    return out


if __name__ == "__main__":
    key = jax.random.PRNGKey(0)
    k_x, k_e1, k_e2, k_p = jax.random.split(key, 4)

    N, F = 16, 8          # nodes, num_features
    E = 40                # edges
    hdim, n_heads = 64, 8

    x = jax.random.normal(k_x, (N, F), jnp.float32)
    src = jax.random.randint(k_e1, (E,), 0, N, jnp.int32)
    dst = jax.random.randint(k_e2, (E,), 0, N, jnp.int32)
    edge_index = jnp.stack([src, dst], axis=0)            # (2, E)

    params = init_params(k_p, F, hdim=hdim, n_heads=n_heads)

    out = model_regressor_forward(x, edge_index, params)
    jax.block_until_ready(out)
    assert out.shape == (1, 1) and bool(jnp.all(jnp.isfinite(out)))
    print("KERNEL_OK")
</pallas_src>

<mosaic_0001>
module attributes {stable_mosaic.version = 11 : i64} {
  func.func @_prep_kernel(%arg0: i32, %arg1: memref<128x8xf32, #tpu.memory_space<vmem>>, %arg2: memref<8x64xf32, #tpu.memory_space<vmem>>, %arg3: memref<64x16xf32, #tpu.memory_space<vmem>>, %arg4: memref<128x64xbf16, #tpu.memory_space<vmem>>, %arg5: memref<128x8xf32, #tpu.memory_space<vmem>>, %arg6: memref<128x8xf32, #tpu.memory_space<vmem>>) attributes {dimension_semantics = [#tpu.dimension_semantics<parallel>], iteration_bounds = array<i64: 1>, scalar_prefetch = 0 : i64, scratch_operands = 0 : i64, tpu.core_type = #tpu.core_type<tc>, window_params = [{transform_indices = @transform_0, window_bounds = array<i64: 128, 8>}, {pipeline_mode = #tpu.pipeline_mode<synchronous>, transform_indices = @transform_1, window_bounds = array<i64: 8, 64>}, {pipeline_mode = #tpu.pipeline_mode<synchronous>, transform_indices = @transform_2, window_bounds = array<i64: 64, 16>}, {transform_indices = @transform_3, window_bounds = array<i64: 128, 64>}, {transform_indices = @transform_4, window_bounds = array<i64: 128, 8>}, {transform_indices = @transform_5, window_bounds = array<i64: 128, 8>}]} {
    %c0 = arith.constant 0 : index
    %c0_0 = arith.constant 0 : index
    %0 = vector.load %arg1[%c0, %c0_0] : memref<128x8xf32, #tpu.memory_space<vmem>>, vector<128x8xf32>
    %1 = arith.truncf %0 : vector<128x8xf32> to vector<128x8xbf16>
    %c0_1 = arith.constant 0 : index
    %c0_2 = arith.constant 0 : index
    %2 = vector.load %arg2[%c0_1, %c0_2] : memref<8x64xf32, #tpu.memory_space<vmem>>, vector<8x64xf32>
    %3 = arith.truncf %2 : vector<8x64xf32> to vector<8x64xbf16>
    %cst = arith.constant dense<0.000000e+00> : vector<128x64xf32>
    %4 = tpu.matmul %1, %3, %cst {dimension_numbers = #tpu.dot_dimension_numbers<[1], [0], [0], [1], [0, 0, 1, 1], [], []>} : vector<128x8xbf16>, vector<8x64xbf16>, vector<128x64xf32> -> vector<128x64xf32>
    %5 = arith.truncf %4 : vector<128x64xf32> to vector<128x64xbf16>
    %c0_3 = arith.constant 0 : index
    %c0_4 = arith.constant 0 : index
    %6 = vector.load %arg3[%c0_3, %c0_4] : memref<64x16xf32, #tpu.memory_space<vmem>>, vector<64x16xf32>
    %7 = arith.truncf %6 : vector<64x16xf32> to vector<64x16xbf16>
    %cst_5 = arith.constant dense<0.000000e+00> : vector<128x16xf32>
    %8 = tpu.matmul %5, %7, %cst_5 {dimension_numbers = #tpu.dot_dimension_numbers<[1], [0], [0], [1], [0, 0, 1, 1], [], []>} : vector<128x64xbf16>, vector<64x16xbf16>, vector<128x16xf32> -> vector<128x16xf32>
    %9 = arith.truncf %4 : vector<128x64xf32> to vector<128x64xbf16>
    %c0_6 = arith.constant 0 : index
    %c0_7 = arith.constant 0 : index
    %10 = vector.load %arg4[%c0_6, %c0_7] : memref<128x64xbf16, #tpu.memory_space<vmem>>, vector<128x64xbf16>
    tpu.vector_store %arg4[%c0_6, %c0_7], %9 {strides = array<i32>} : memref<128x64xbf16, #tpu.memory_space<vmem>>, vector<128x64xbf16>,
    %11 = vector.extract_strided_slice %8 {offsets = [0, 0], sizes = [128, 8], strides = [1, 1]} : vector<128x16xf32> to vector<128x8xf32>
    %c0_8 = arith.constant 0 : index
    %c0_9 = arith.constant 0 : index
    %12 = vector.load %arg5[%c0_8, %c0_9] : memref<128x8xf32, #tpu.memory_space<vmem>>, vector<128x8xf32>
    tpu.vector_store %arg5[%c0_8, %c0_9], %11 {strides = array<i32>} : memref<128x8xf32, #tpu.memory_space<vmem>>, vector<128x8xf32>,
    %13 = vector.extract_strided_slice %8 {offsets = [0, 8], sizes = [128, 8], strides = [1, 1]} : vector<128x16xf32> to vector<128x8xf32>
    %c0_10 = arith.constant 0 : index
    %c0_11 = arith.constant 0 : index
    %14 = vector.load %arg6[%c0_10, %c0_11] : memref<128x8xf32, #tpu.memory_space<vmem>>, vector<128x8xf32>
    tpu.vector_store %arg6[%c0_10, %c0_11], %13 {strides = array<i32>} : memref<128x8xf32, #tpu.memory_space<vmem>>, vector<128x8xf32>,
    return
  }
  func.func @transform_0(%arg0: i32) -> (i32, i32) {
    %c0_i32 = arith.constant 0 : i32
    %c0_i32_0 = arith.constant 0 : i32
    return %arg0, %c0_i32 : i32, i32
  }
  func.func @transform_1(%arg0: i32) -> (i32, i32) {
    %c0_i32 = arith.constant 0 : i32
    %c0_i32_0 = arith.constant 0 : i32
    %c0_i32_1 = arith.constant 0 : i32
    return %c0_i32, %c0_i32_0 : i32, i32
  }
  func.func @transform_2(%arg0: i32) -> (i32, i32) {
    %c0_i32 = arith.constant 0 : i32
    %c0_i32_0 = arith.constant 0 : i32
    %c0_i32_1 = arith.constant 0 : i32
    return %c0_i32, %c0_i32_0 : i32, i32
  }
  func.func @transform_3(%arg0: i32) -> (i32, i32) {
    %c0_i32 = arith.constant 0 : i32
    %c0_i32_0 = arith.constant 0 : i32
    return %arg0, %c0_i32 : i32, i32
  }
  func.func @transform_4(%arg0: i32) -> (i32, i32) {
    %c0_i32 = arith.constant 0 : i32
    %c0_i32_0 = arith.constant 0 : i32
    return %arg0, %c0_i32 : i32, i32
  }
  func.func @transform_5(%arg0: i32) -> (i32, i32) {
    %c0_i32 = arith.constant 0 : i32
    %c0_i32_0 = arith.constant 0 : i32
    return %arg0, %c0_i32 : i32, i32
  }
}

</mosaic_0001>

<llo_original>
// kernel: tpu_custom_call.1
$region0: #{tpu_custom_call.1}
  #allocation0 [shape = 'u32[]', space=smem, size = 0x4, offset = 0x4, fixed_abs, tag = 'smem constant byte address 0x4 - core index']
  #allocation1 [shape = 'u32[72,128]{1,0:T(1,128)}', space=vmem, size = 0x9000, scoped, tag = 'internal scratch']
  %s0 = inlined_call_operand.vmem [shape: f32[128,8], index: 0, kind: input, shape index: {}]
  %s1 = inlined_call_operand.vmem [shape: f32[8,64], index: 1, kind: input, shape index: {}]
  %s2 = inlined_call_operand.vmem [shape: f32[64,16], index: 2, kind: input, shape index: {}]
  %s3 = inlined_call_operand.vmem [shape: bf16[128,64], index: 3, kind: output, shape index: {0}]
  %s4 = inlined_call_operand.vmem [shape: f32[128,8], index: 4, kind: output, shape index: {1}]
  %s5 = inlined_call_operand.vmem [shape: f32[128,8], index: 5, kind: output, shape index: {2}]
  %6 = xla_tuple %s3, %s4, %s5
  %s7 = sld [smem:[#allocation0]]
  $region38: #{tpu_custom_call.1} parent=0
    _
  %s9 = ssub.s32 1, %s7
  %s10 = scalar_select 0, %s9, %s7
  // Predicated region
  $region2: #{tpu_custom_call.1} parent=0 // pred_check
    _
  $region3: #{tpu_custom_call.1} parent=0 // pred_check_branch
    %12 = sbr.rel (0) target = $region5
  $region4: #{tpu_custom_call.1} parent=0 // pred_region
    _
  $region5: #{tpu_custom_call.1} parent=0 // pred_fallthru
    _
  // Predicated region
  $region6: #{tpu_custom_call.1} parent=0 // pred_check
    _
  $region7: #{tpu_custom_call.1} parent=0 // pred_check_branch
    %14 = sbr.rel (0) target = $region9
  $region8: #{tpu_custom_call.1} parent=0 // pred_region
    _
  $region9: #{tpu_custom_call.1} parent=0 // pred_fallthru
    _
  // Predicated region
  $region10: #{tpu_custom_call.1} parent=0 // pred_check
    _
  $region11: #{tpu_custom_call.1} parent=0 // pred_check_branch
    %16 = sbr.rel (0) target = $region13
  $region12: #{tpu_custom_call.1} parent=0 // pred_region
    _
  $region13: #{tpu_custom_call.1} parent=0 // pred_fallthru
    _
  %v18 = vld [vmem:[%s0] sm:$0xff]
  %v19 = vld [vmem:[%s0 + $0x8] sm:$0xff]
  %v20 = vld [vmem:[%s0 + $0x10] sm:$0xff]
  %v21 = vld [vmem:[%s0 + $0x18] sm:$0xff]
  %v22 = vld [vmem:[%s0 + $0x20] sm:$0xff]
  %v23 = vld [vmem:[%s0 + $0x28] sm:$0xff]
  %v24 = vld [vmem:[%s0 + $0x30] sm:$0xff]
  %v25 = vld [vmem:[%s0 + $0x38] sm:$0xff]
  %v26 = vld [vmem:[%s0 + $0x40] sm:$0xff]
  %v27 = vld [vmem:[%s0 + $0x48] sm:$0xff]
  %v28 = vld [vmem:[%s0 + $0x50] sm:$0xff]
  %v29 = vld [vmem:[%s0 + $0x58] sm:$0xff]
  %v30 = vld [vmem:[%s0 + $0x60] sm:$0xff]
  %v31 = vld [vmem:[%s0 + $0x68] sm:$0xff]
  %v32 = vld [vmem:[%s0 + $0x70] sm:$0xff]
  %v33 = vld [vmem:[%s0 + $0x78] sm:$0xff]
  %v34 = vpack.c.bf16 %v19, %v18
  %v35 = vpack.c.bf16 %v21, %v20
  %v36 = vpack.c.bf16 %v23, %v22
  %v37 = vpack.c.bf16 %v25, %v24
  %v38 = vpack.c.bf16 %v27, %v26
  %v39 = vpack.c.bf16 %v29, %v28
  %v40 = vpack.c.bf16 %v31, %v30
  %v41 = vpack.c.bf16 %v33, %v32
  %v42 = vld [vmem:[%s1] sm:$0xff]
  %v43 = vpack.c.bf16 %v42, %v42
  %vm44 = vcmask 64512
  %v46 = vsel %vm44, %v34, 0
  %v49 = vsel %vm44, %v35, 0
  %v52 = vsel %vm44, %v36, 0
  %v55 = vsel %vm44, %v37, 0
  %v58 = vsel %vm44, %v38, 0
  %v61 = vsel %vm44, %v39, 0
  %v64 = vsel %vm44, %v40, 0
  %v67 = vsel %vm44, %v41, 0
  %vm69 = vcmask 1043456
  %v71 = vsel %vm69, %v43, 0
  %73 = vmatpush.bf16.msra.mxu0 0
  %74 = vmatpush.bf16.msra.mxu0 0
  %75 = vmatpush.bf16.msra.mxu0 0
  %76 = vmatpush.bf16.msra.mxu0 0
  %77 = vmatpush.bf16.msra.mxu0 0
  %78 = vmatpush.bf16.msra.mxu0 0
  %79 = vmatpush.bf16.msra.mxu0 0
  %80 = vmatpush.bf16.msra.mxu0 %v71
  %81 = vmatmul.bf16.gmra.mxu0 %v46
  %v82 = vpop.f32.mrf.mxu0
  %v83 = vadd.f32 0.0, %v82
  %v84 = vpop.f32.mrf.mxu0
  %v85 = vadd.f32 0.0, %v84
  %86 = vmatmul.bf16.gmra.mxu0 %v49
  %v87 = vpop.f32.mrf.mxu0
  %v88 = vadd.f32 0.0, %v87
  %v89 = vpop.f32.mrf.mxu0
  %v90 = vadd.f32 0.0, %v89
  %91 = vmatmul.bf16.gmra.mxu0 %v52
  %v92 = vpop.f32.mrf.mxu0
  %v93 = vadd.f32 0.0, %v92
  %v94 = vpop.f32.mrf.mxu0
  %v95 = vadd.f32 0.0, %v94
  %96 = vmatmul.bf16.gmra.mxu0 %v55
  %v97 = vpop.f32.mrf.mxu0
  %v98 = vadd.f32 0.0, %v97
  %v99 = vpop.f32.mrf.mxu0
  %v100 = vadd.f32 0.0, %v99
  %101 = vmatmul.bf16.gmra.mxu0 %v58
  %v102 = vpop.f32.mrf.mxu0
  %v103 = vadd.f32 0.0, %v102
  %v104 = vpop.f32.mrf.mxu0
  %v105 = vadd.f32 0.0, %v104
  %106 = vmatmul.bf16.gmra.mxu0 %v61
  %v107 = vpop.f32.mrf.mxu0
  %v108 = vadd.f32 0.0, %v107
  %v109 = vpop.f32.mrf.mxu0
  %v110 = vadd.f32 0.0, %v109
  %111 = vmatmul.bf16.gmra.mxu0 %v64
  %v112 = vpop.f32.mrf.mxu0
  %v113 = vadd.f32 0.0, %v112
  %v114 = vpop.f32.mrf.mxu0
  %v115 = vadd.f32 0.0, %v114
  %116 = vmatmul.bf16.gmra.mxu0 %v67
  %v117 = vpop.f32.mrf.mxu0
  %v118 = vadd.f32 0.0, %v117
  %v119 = vpop.f32.mrf.mxu0
  %v120 = vadd.f32 0.0, %v119
  %121 = vdwg.mxu0
  %v122 = vpack.c.bf16 %v83, %v83
  %v123 = vpack.c.bf16 %v85, %v85
  %v124 = vpack.c.bf16 %v88, %v88
  %v125 = vpack.c.bf16 %v90, %v90
  %v126 = vpack.c.bf16 %v93, %v93
  %v127 = vpack.c.bf16 %v95, %v95
  %v128 = vpack.c.bf16 %v98, %v98
  %v129 = vpack.c.bf16 %v100, %v100
  %v130 = vpack.c.bf16 %v103, %v103
  %v131 = vpack.c.bf16 %v105, %v105
  %v132 = vpack.c.bf16 %v108, %v108
  %v133 = vpack.c.bf16 %v110, %v110
  %v134 = vpack.c.bf16 %v113, %v113
  %v135 = vpack.c.bf16 %v115, %v115
  %v136 = vpack.c.bf16 %v118, %v118
  %v137 = vpack.c.bf16 %v120, %v120
  %v138 = vld [vmem:[%s2] sm:$0xff]
  %v139 = vld [vmem:[%s2 + $0x8] sm:$0xff]
  %v140 = vld [vmem:[%s2 + $0x10] sm:$0xff]
  %v141 = vld [vmem:[%s2 + $0x18] sm:$0xff]
  %v142 = vld [vmem:[%s2 + $0x20] sm:$0xff]
  %v143 = vld [vmem:[%s2 + $0x28] sm:$0xff]
  %v144 = vld [vmem:[%s2 + $0x30] sm:$0xff]
  %v145 = vld [vmem:[%s2 + $0x38] sm:$0xff]
  %v146 = vpack.c.bf16 %v139, %v138
  %v147 = vpack.c.bf16 %v141, %v140
  %v148 = vpack.c.bf16 %v143, %v142
  %v149 = vpack.c.bf16 %v145, %v144
  %v166 = vunpack.c.l.b16 %v122
  %v167 = vunpack.c.l.b16 %v123
  %v168 = vunpack.c.l.b16 %v124
  %v169 = vunpack.c.l.b16 %v125
  %v170 = vunpack.c.l.b16 %v126
  %v171 = vunpack.c.l.b16 %v127
  %v172 = vunpack.c.l.b16 %v128
  %v173 = vunpack.c.l.b16 %v129
  %v174 = vunpack.c.l.b16 %v130
  %v175 = vunpack.c.l.b16 %v131
  %v176 = vunpack.c.l.b16 %v132
  %v177 = vunpack.c.l.b16 %v133
  %v178 = vunpack.c.l.b16 %v134
  %v179 = vunpack.c.l.b16 %v135
  %v180 = vunpack.c.l.b16 %v136
  %v181 = vunpack.c.l.b16 %v137
  %v182 = vpack.c.b16 %v167, %v166
  %v183 = vpack.c.b16 %v169, %v168
  %v184 = vpack.c.b16 %v171, %v170
  %v185 = vpack.c.b16 %v173, %v172
  %v186 = vpack.c.b16 %v175, %v174
  %v187 = vpack.c.b16 %v177, %v176
  %v188 = vpack.c.b16 %v179, %v178
  %v189 = vpack.c.b16 %v181, %v180
  %vm190 = vcmask 523264
  %v192 = vsel %vm190, %v182, 0
  %v195 = vsel %vm190, %v183, 0
  %v198 = vsel %vm190, %v184, 0
  %v201 = vsel %vm190, %v185, 0
  %v204 = vsel %vm190, %v186, 0
  %v207 = vsel %vm190, %v187, 0
  %v210 = vsel %vm190, %v188, 0
  %v213 = vsel %vm190, %v189, 0
  %215 = vmatpush.bf16.msra.mxu0 0
  %216 = vmatpush.bf16.msra.mxu0 0
  %217 = vmatpush.bf16.msra.mxu0 0
  %218 = vmatpush.bf16.msra.mxu0 0
  %219 = vmatpush.bf16.msra.mxu0 %v149
  %220 = vmatpush.bf16.msra.mxu0 %v148
  %221 = vmatpush.bf16.msra.mxu0 %v147
  %222 = vmatpush.bf16.msra.mxu0 %v146
  %223 = vmatmul.bf16.gmra.mxu0 %v192
  %v224 = vpop.f32.mrf.mxu0
  %v225 = vadd.f32 0.0, %v224
  %v226 = vpop.f32.mrf.mxu0
  %v227 = vadd.f32 0.0, %v226
  %228 = vmatmul.bf16.gmra.mxu0 %v195
  %v229 = vpop.f32.mrf.mxu0
  %v230 = vadd.f32 0.0, %v229
  %v231 = vpop.f32.mrf.mxu0
  %v232 = vadd.f32 0.0, %v231
  %233 = vmatmul.bf16.gmra.mxu0 %v198
  %v234 = vpop.f32.mrf.mxu0
  %v235 = vadd.f32 0.0, %v234
  %v236 = vpop.f32.mrf.mxu0
  %v237 = vadd.f32 0.0, %v236
  %238 = vmatmul.bf16.gmra.mxu0 %v201
  %v239 = vpop.f32.mrf.mxu0
  %v240 = vadd.f32 0.0, %v239
  %v241 = vpop.f32.mrf.mxu0
  %v242 = vadd.f32 0.0, %v241
  %243 = vmatmul.bf16.gmra.mxu0 %v204
  %v244 = vpop.f32.mrf.mxu0
  %v245 = vadd.f32 0.0, %v244
  %v246 = vpop.f32.mrf.mxu0
  %v247 = vadd.f32 0.0, %v246
  %248 = vmatmul.bf16.gmra.mxu0 %v207
  %v249 = vpop.f32.mrf.mxu0
  %v250 = vadd.f32 0.0, %v249
  %v251 = vpop.f32.mrf.mxu0
  %v252 = vadd.f32 0.0, %v251
  %253 = vmatmul.bf16.gmra.mxu0 %v210
  %v254 = vpop.f32.mrf.mxu0
  %v255 = vadd.f32 0.0, %v254
  %v256 = vpop.f32.mrf.mxu0
  %v257 = vadd.f32 0.0, %v256
  %258 = vmatmul.bf16.gmra.mxu0 %v213
  %v259 = vpop.f32.mrf.mxu0
  %v260 = vadd.f32 0.0, %v259
  %v261 = vpop.f32.mrf.mxu0
  %v262 = vadd.f32 0.0, %v261
  %263 = vdwg.mxu0
  %vm264 = vcmask 519168
  %265 = vst.msk [vmem:[%s3] sm:$0xf] %vm264, %v122
  %266 = vst.msk [vmem:[%s3 + $0x4] sm:$0xf] %vm264, %v123
  %267 = vst.msk [vmem:[%s3 + $0x8] sm:$0xf] %vm264, %v124
  %268 = vst.msk [vmem:[%s3 + $0xc] sm:$0xf] %vm264, %v125
  %269 = vst.msk [vmem:[%s3 + $0x10] sm:$0xf] %vm264, %v126
  %270 = vst.msk [vmem:[%s3 + $0x14] sm:$0xf] %vm264, %v127
  %271 = vst.msk [vmem:[%s3 + $0x18] sm:$0xf] %vm264, %v128
  %272 = vst.msk [vmem:[%s3 + $0x1c] sm:$0xf] %vm264, %v129
  %273 = vst.msk [vmem:[%s3 + $0x20] sm:$0xf] %vm264, %v130
  %274 = vst.msk [vmem:[%s3 + $0x24] sm:$0xf] %vm264, %v131
  %275 = vst.msk [vmem:[%s3 + $0x28] sm:$0xf] %vm264, %v132
  %276 = vst.msk [vmem:[%s3 + $0x2c] sm:$0xf] %vm264, %v133
  %277 = vst.msk [vmem:[%s3 + $0x30] sm:$0xf] %vm264, %v134
  %278 = vst.msk [vmem:[%s3 + $0x34] sm:$0xf] %vm264, %v135
  %279 = vst.msk [vmem:[%s3 + $0x38] sm:$0xf] %vm264, %v136
  %280 = vst.msk [vmem:[%s3 + $0x3c] sm:$0xf] %vm264, %v137
  %281 = vst.msk [vmem:[%s4] sm:$0xff] %vm44, %v225
  %282 = vst.msk [vmem:[%s4 + $0x8] sm:$0xff] %vm44, %v227
  %283 = vst.msk [vmem:[%s4 + $0x10] sm:$0xff] %vm44, %v230
  %284 = vst.msk [vmem:[%s4 + $0x18] sm:$0xff] %vm44, %v232
  %285 = vst.msk [vmem:[%s4 + $0x20] sm:$0xff] %vm44, %v235
  %286 = vst.msk [vmem:[%s4 + $0x28] sm:$0xff] %vm44, %v237
  %287 = vst.msk [vmem:[%s4 + $0x30] sm:$0xff] %vm44, %v240
  %288 = vst.msk [vmem:[%s4 + $0x38] sm:$0xff] %vm44, %v242
  %289 = vst.msk [vmem:[%s4 + $0x40] sm:$0xff] %vm44, %v245
  %290 = vst.msk [vmem:[%s4 + $0x48] sm:$0xff] %vm44, %v247
  %291 = vst.msk [vmem:[%s4 + $0x50] sm:$0xff] %vm44, %v250
  %292 = vst.msk [vmem:[%s4 + $0x58] sm:$0xff] %vm44, %v252
  %293 = vst.msk [vmem:[%s4 + $0x60] sm:$0xff] %vm44, %v255
  %294 = vst.msk [vmem:[%s4 + $0x68] sm:$0xff] %vm44, %v257
  %295 = vst.msk [vmem:[%s4 + $0x70] sm:$0xff] %vm44, %v260
  %296 = vst.msk [vmem:[%s4 + $0x78] sm:$0xff] %vm44, %v262
  %313 = vrot.lane.b32.xlu0 %v225, 120
  %v314 = vpop.permute.xlu0 %313
  %315 = vrot.lane.b32.xlu0 %v227, 120
  %v316 = vpop.permute.xlu0 %315
  %317 = vrot.lane.b32.xlu0 %v230, 120
  %v318 = vpop.permute.xlu0 %317
  %319 = vrot.lane.b32.xlu0 %v232, 120
  %v320 = vpop.permute.xlu0 %319
  %321 = vrot.lane.b32.xlu0 %v235, 120
  %v322 = vpop.permute.xlu0 %321
  %323 = vrot.lane.b32.xlu0 %v237, 120
  %v324 = vpop.permute.xlu0 %323
  %325 = vrot.lane.b32.xlu0 %v240, 120
  %v326 = vpop.permute.xlu0 %325
  %327 = vrot.lane.b32.xlu0 %v242, 120
  %v328 = vpop.permute.xlu0 %327
  %329 = vrot.lane.b32.xlu0 %v245, 120
  %v330 = vpop.permute.xlu0 %329
  %331 = vrot.lane.b32.xlu0 %v247, 120
  %v332 = vpop.permute.xlu0 %331
  %333 = vrot.lane.b32.xlu0 %v250, 120
  %v334 = vpop.permute.xlu0 %333
  %335 = vrot.lane.b32.xlu0 %v252, 120
  %v336 = vpop.permute.xlu0 %335
  %337 = vrot.lane.b32.xlu0 %v255, 120
  %v338 = vpop.permute.xlu0 %337
  %339 = vrot.lane.b32.xlu0 %v257, 120
  %v340 = vpop.permute.xlu0 %339
  %341 = vrot.lane.b32.xlu0 %v260, 120
  %v342 = vpop.permute.xlu0 %341
  %343 = vrot.lane.b32.xlu0 %v262, 120
  %v344 = vpop.permute.xlu0 %343
  %361 = vst.msk [vmem:[%s5] sm:$0xff] %vm44, %v314
  %362 = vst.msk [vmem:[%s5 + $0x8] sm:$0xff] %vm44, %v316
  %363 = vst.msk [vmem:[%s5 + $0x10] sm:$0xff] %vm44, %v318
  %364 = vst.msk [vmem:[%s5 + $0x18] sm:$0xff] %vm44, %v320
  %365 = vst.msk [vmem:[%s5 + $0x20] sm:$0xff] %vm44, %v322
  %366 = vst.msk [vmem:[%s5 + $0x28] sm:$0xff] %vm44, %v324
  %367 = vst.msk [vmem:[%s5 + $0x30] sm:$0xff] %vm44, %v326
  %368 = vst.msk [vmem:[%s5 + $0x38] sm:$0xff] %vm44, %v328
  %369 = vst.msk [vmem:[%s5 + $0x40] sm:$0xff] %vm44, %v330
  %370 = vst.msk [vmem:[%s5 + $0x48] sm:$0xff] %vm44, %v332
  %371 = vst.msk [vmem:[%s5 + $0x50] sm:$0xff] %vm44, %v334
  %372 = vst.msk [vmem:[%s5 + $0x58] sm:$0xff] %vm44, %v336
  %373 = vst.msk [vmem:[%s5 + $0x60] sm:$0xff] %vm44, %v338
  %374 = vst.msk [vmem:[%s5 + $0x68] sm:$0xff] %vm44, %v340
  %375 = vst.msk [vmem:[%s5 + $0x70] sm:$0xff] %vm44, %v342
  %376 = vst.msk [vmem:[%s5 + $0x78] sm:$0xff] %vm44, %v344
  // Predicated region
  $region14: #{tpu_custom_call.1} parent=0 // pred_check
    _
  $region15: #{tpu_custom_call.1} parent=0 // pred_check_branch
    %378 = sbr.rel (0) target = $region17
  $region16: #{tpu_custom_call.1} parent=0 // pred_region
    _
  $region17: #{tpu_custom_call.1} parent=0 // pred_fallthru
    _
  // Predicated region
  $region18: #{tpu_custom_call.1} parent=0 // pred_check
    _
  $region19: #{tpu_custom_call.1} parent=0 // pred_check_branch
    %380 = sbr.rel (0) target = $region21
  $region20: #{tpu_custom_call.1} parent=0 // pred_region
    _
  $region21: #{tpu_custom_call.1} parent=0 // pred_fallthru
    _
  // Predicated region
  $region22: #{tpu_custom_call.1} parent=0 // pred_check
    _
  $region23: #{tpu_custom_call.1} parent=0 // pred_check_branch
    %382 = sbr.rel (0) target = $region25
  $region24: #{tpu_custom_call.1} parent=0 // pred_region
    _
  $region25: #{tpu_custom_call.1} parent=0 // pred_fallthru
    _
  // Predicated region
  $region26: #{tpu_custom_call.1} parent=0 // pred_check
    _
  $region27: #{tpu_custom_call.1} parent=0 // pred_check_branch
    %384 = sbr.rel (0) target = $region29
  $region28: #{tpu_custom_call.1} parent=0 // pred_region
    _
  $region29: #{tpu_custom_call.1} parent=0 // pred_fallthru
    _
  // Predicated region
  $region30: #{tpu_custom_call.1} parent=0 // pred_check
    _
  $region31: #{tpu_custom_call.1} parent=0 // pred_check_branch
    %386 = sbr.rel (0) target = $region33
  $region32: #{tpu_custom_call.1} parent=0 // pred_region
    _
  $region33: #{tpu_custom_call.1} parent=0 // pred_fallthru
    _
  // Predicated region
  $region34: #{tpu_custom_call.1} parent=0 // pred_check
    _
  $region35: #{tpu_custom_call.1} parent=0 // pred_check_branch
    %388 = sbr.rel (0) target = $region37
  $region36: #{tpu_custom_call.1} parent=0 // pred_region
    _
  $region37: #{tpu_custom_call.1} parent=0 // pred_fallthru
    _

</llo_original>
